<compile_context>
chip_gen: v7x
topology: tpu7x:2x2x1
jax: 0.10.0
libtpu: 0.0.40
codegen_flags: <defaults>
</compile_context>

<pallas_src>
import functools

import jax
import jax.numpy as jnp
from jax import lax
from jax.experimental import pallas as pl
from jax.experimental.pallas import tpu as pltpu


# ------------------------------------------------------------------------------------
# pltpu.roll shift-convention probe (run once, host side)
# ------------------------------------------------------------------------------------
def _roll_probe_kernel(x_ref, o_ref):
    o_ref[...] = pltpu.roll(x_ref[...], shift=1, axis=1)


def calibrate_roll_shift_sign():
    # With numpy/jnp.roll semantics (out[j] = in[j-1]), rolling [0..127] by +1
    # puts 127 at lane 0; with the opposite convention lane 0 holds 1.
    x = jnp.tile(jnp.arange(128, dtype=jnp.float32)[None, :], (8, 1))
    vmem = pl.BlockSpec(memory_space=pltpu.MemorySpace.VMEM)
    y = pl.pallas_call(
        _roll_probe_kernel,
        out_shape=jax.ShapeDtypeStruct((8, 128), jnp.float32),
        in_specs=[vmem], out_specs=vmem,
    )(x)
    return -1 if float(y[0, 0]) > 64.0 else 1


# ------------------------------------------------------------------------------------
# Fused kernel: 2-layer bi-LSTM + attention + ReLU + FC + LogSoftmax
# ------------------------------------------------------------------------------------
def _lstm_attn_kernel(ids_ref, wih0e_ref, whh0_ref, b0_ref,
                      wih1_ref, whh1_ref, b1_ref,
                      gfm_ref, sigm_ref, hfm_ref, hbm_ref,
                      fcw_ref, fcb_ref,
                      out_ref,
                      gxc_scr, hseq_scr, out0_scr, out1_scr,
                      *, roll_sign):
    L, NP, G = gxc_scr.shape          # G = 8H (=128 for H=16: one full vreg lane width)
    H = G // 8
    LN = L * NP

    # ---- one-time constants (off the serial path) ----
    gfm = gfm_ref[...]                # (1,G): 1.0 on forward-direction gate columns
    gbm = 1.0 - gfm
    sig_sel = sigm_ref[...] != 0.0    # (1,G): True on sigmoid lanes (i,f,o), False on g
    hfm = hfm_ref[...]                # (1,G): 1.0 on lanes [0,H)   (fwd h)
    hbm = hbm_ref[...]                # (1,G): 1.0 on lanes [H,2H)  (bwd h)

    def align(v, block):
        # Bring gate block `block` (lanes [2H*block, 2H*(block+1))) to lanes [0, 2H).
        return pltpu.roll(v, shift=(roll_sign * 2 * H * block) % G, axis=1)

    def bilstm(gx_flat, whh_ref, hseq):
        # gx_flat: (L*NP, G) hoisted input projection (+bias), time-major rows,
        # gate-column blocks [i | f | o | g], each 2H wide holding [fwd | bwd].
        # 1) fwd/bwd time pre-combine (off path): fwd cols take time s, bwd cols time L-1-s.
        for s in range(L):
            gxc_scr[s] = (gx_flat[s * NP:(s + 1) * NP, :] * gfm
                          + gx_flat[(L - 1 - s) * NP:(L - s) * NP, :] * gbm)
        # 2) serial recurrence: only h @ W_hh + the gate nonlinearities stay on the chain.
        whh = whh_ref[...]                          # (G,G), rows >= 2H are zero
        h = jnp.zeros((NP, G), jnp.float32)         # lanes [0,2H) = [h_fwd | h_bwd]
        c = jnp.zeros((NP, G), jnp.float32)
        for s in range(L):
            gates = gxc_scr[s] + jnp.dot(h, whh, preferred_element_type=jnp.float32)
            act = jnp.where(sig_sel, jax.nn.sigmoid(gates), jnp.tanh(gates))
            f_al = align(act, 1)                    # forget gates -> lanes [0,2H)
            o_al = align(act, 2)                    # output gates
            g_al = align(act, 3)                    # cell gates
            c = f_al * c + act * g_al               # input gates already at lanes [0,2H)
            h = o_al * jnp.tanh(c)                  # lanes >= 2H hold bounded garbage,
            hseq[s] = h                             #   multiplied by zero weight rows later
        return h                                    # lanes [0,2H) = [h_fwd(L-1) | h_bwd(0)]

    # ---- layer 0: embedding gather fused as a one-hot MXU matmul against
    #      Wih0_eff = embed @ W_ih0 (no (L*N, E) activation ever materializes) ----
    lane = lax.broadcasted_iota(jnp.int32, (LN, G), 1)
    onehot = (ids_ref[...] == lane).astype(jnp.float32)                       # (LN, G)
    gx0 = jnp.dot(onehot, wih0e_ref[...],
                  preferred_element_type=jnp.float32) + b0_ref[...]
    q0 = bilstm(gx0, whh0_ref, hseq_scr)

    # off-path fwd/bwd time un-shuffle of layer-0 outputs (also zeroes lanes >= 2H)
    for t in range(L):
        out0_scr[t * NP:(t + 1) * NP, :] = hseq_scr[t] * hfm + hseq_scr[L - 1 - t] * hbm

    # ---- layer 1 ----
    gx1 = jnp.dot(out0_scr[...], wih1_ref[...],
                  preferred_element_type=jnp.float32) + b1_ref[...]
    q1 = bilstm(gx1, whh1_ref, hseq_scr)
    for t in range(L):
        out1_scr[t] = hseq_scr[t] * hfm + hseq_scr[L - 1 - t] * hbm

    # ---- attention over time; query = mean of the two layers' final hidden states ----
    query = (0.5 * (q0 + q1)) * (hfm + hbm)                                   # (NP,G)
    seq = out1_scr[...]                                                       # (L,NP,G)
    scores = jnp.sum(seq * query[None, :, :], axis=-1, keepdims=True)         # (L,NP,1)
    m = jnp.max(scores, axis=0, keepdims=True)
    e = jnp.exp(scores - m)
    attn = e / jnp.sum(e, axis=0, keepdims=True)                              # softmax over time
    ctx = jnp.sum(seq * attn, axis=0)                                         # (NP,G)

    # ---- ReLU -> (dropout = identity in eval) -> FC -> LogSoftmax ----
    # TODO(synk): training-mode nn.Dropout (inter-layer LSTM & pre-FC) is not implemented.
    feat = jnp.maximum(ctx, 0.0)
    z = jnp.dot(feat, fcw_ref[...], preferred_element_type=jnp.float32) + fcb_ref[...]
    zmax = jnp.max(z, axis=-1, keepdims=True)
    zs = z - zmax
    out_ref[...] = zs - jnp.log(jnp.sum(jnp.exp(zs), axis=-1, keepdims=True))


# ------------------------------------------------------------------------------------
# Weight packing: PyTorch per-direction (i, f, g, o) weights -> fused kernel layout
# ------------------------------------------------------------------------------------
def pack_params(params, H):
    G = 8 * H
    embed = params["embed"]
    V, E = embed.shape
    assert V <= G, "one-hot gather width (8H lanes) must cover the vocabulary"
    layers = params["layers"]
    assert len(layers) == 2, "fc width hidden_size*n_layers requires n_layers == 2"

    def gate_cols(wf, wb):
        # PyTorch gate-column order (i, f, g, o) per direction -> kernel layout
        # [i_f,i_b, f_f,f_b, o_f,o_b, g_f,g_b] (each block H wide).
        def blk(w, g):
            return w[..., g * H:(g + 1) * H]
        return jnp.concatenate(
            [blk(wf, 0), blk(wb, 0), blk(wf, 1), blk(wb, 1),
             blk(wf, 3), blk(wb, 3), blk(wf, 2), blk(wb, 2)], axis=-1)

    def pack_layer(layer):
        f, b = layer["fwd"], layer["bwd"]
        wih = gate_cols(f["w_ih"], b["w_ih"])                                  # (in, G)
        whh_f = gate_cols(f["w_hh"], jnp.zeros_like(f["w_hh"]))                # h_fwd -> fwd cols
        whh_b = gate_cols(jnp.zeros_like(b["w_hh"]), b["w_hh"])                # h_bwd -> bwd cols
        whh = jnp.concatenate([whh_f, whh_b], axis=0)                          # (2H, G)
        whh_wide = jnp.zeros((G, G), jnp.float32).at[:2 * H].set(whh)          # rows >= 2H zero
        bias = gate_cols((f["b_ih"] + f["b_hh"])[None, :],
                         (b["b_ih"] + b["b_hh"])[None, :])                     # (1, G)
        return wih, whh_wide, bias

    wih0, whh0, b0 = pack_layer(layers[0])
    wih1, whh1, b1 = pack_layer(layers[1])

    # Fold the embedding into layer 0's projection: gx0 = onehot(ids) @ (embed @ W_ih0).
    embed_p = jnp.zeros((G, E), jnp.float32).at[:V].set(embed)
    wih0_eff = jnp.dot(embed_p, wih0, precision=jax.lax.Precision.HIGHEST)     # (G, G)
    wih1_pad = jnp.zeros((G, G), jnp.float32).at[:2 * H].set(wih1)             # rows >= 2H zero

    lane = jnp.arange(G)
    gfm = ((lane % (2 * H)) < H).astype(jnp.float32)[None, :]                  # fwd gate cols
    sigm = (lane < 6 * H).astype(jnp.float32)[None, :]                         # sigmoid lanes
    hfm = (lane < H).astype(jnp.float32)[None, :]
    hbm = ((lane >= H) & (lane < 2 * H)).astype(jnp.float32)[None, :]

    fcw = params["fc_w"]                                                       # (2H, C)
    fcw_pad = jnp.zeros((G, fcw.shape[-1]), jnp.float32).at[:2 * H].set(fcw)

    return dict(wih0e=wih0_eff, whh0=whh0, b0=b0,
                wih1=wih1_pad, whh1=whh1, b1=b1,
                gfm=gfm, sigm=sigm, hfm=hfm, hbm=hbm,
                fcw=fcw_pad, fcb=params["fc_b"])


# ------------------------------------------------------------------------------------
# Forward wrapper
# ------------------------------------------------------------------------------------
def lstm_attention_forward(token_ids, packed, *, roll_sign=-1):
    N, L = token_ids.shape
    G = packed["b0"].shape[-1]                    # 8H
    C = packed["fcw"].shape[-1]
    NP = max(8, ((N + 7) // 8) * 8)               # pad batch to a full sublane tile

    # Tiny int32 index prep (time-major row t*NP+n = token (n, t)); pad ids use id 0
    # and the padded output rows are sliced off below.
    ids_tm = jnp.transpose(token_ids).astype(jnp.int32)        # (L, N)
    ids_tm = jnp.pad(ids_tm, ((0, 0), (0, NP - N)))            # (L, NP)
    ids_tm = ids_tm.reshape(L * NP, 1)

    kernel = functools.partial(_lstm_attn_kernel, roll_sign=roll_sign)
    vmem = pl.BlockSpec(memory_space=pltpu.MemorySpace.VMEM)
    out = pl.pallas_call(
        kernel,
        out_shape=jax.ShapeDtypeStruct((NP, C), jnp.float32),
        in_specs=[vmem] * 13,
        out_specs=vmem,
        scratch_shapes=[
            pltpu.VMEM((L, NP, G), jnp.float32),     # gxc  : time-combined gate inputs
            pltpu.VMEM((L, NP, G), jnp.float32),     # hseq : raw per-step hidden states
            pltpu.VMEM((L * NP, G), jnp.float32),    # out0 : layer-0 output, time-aligned (flat)
            pltpu.VMEM((L, NP, G), jnp.float32),     # out1 : layer-1 output, time-aligned
        ],
        compiler_params=pltpu.CompilerParams(vmem_limit_bytes=16 * 1024 * 1024),
    )(ids_tm, packed["wih0e"], packed["whh0"], packed["b0"],
      packed["wih1"], packed["whh1"], packed["b1"],
      packed["gfm"], packed["sigm"], packed["hfm"], packed["hbm"],
      packed["fcw"], packed["fcb"])
    return out[:N]


# ------------------------------------------------------------------------------------
# Deterministic synthetic parameters (PyTorch-style per-direction layout, gate order i,f,g,o)
# ------------------------------------------------------------------------------------
def init_params(key, vocab, E, H, C, n_layers=2):
    keys = jax.random.split(key, 64)
    it = iter(keys)

    def rnd(shape, scale=0.1):
        return (scale * jax.random.normal(next(it), shape)).astype(jnp.float32)

    layers = []
    in_dim = E
    for _ in range(n_layers):
        layer = {}
        for d in ("fwd", "bwd"):
            layer[d] = dict(w_ih=rnd((in_dim, 4 * H)),
                            w_hh=rnd((H, 4 * H)),
                            b_ih=rnd((4 * H,)),
                            b_hh=rnd((4 * H,)))
        layers.append(layer)
        in_dim = 2 * H
    return dict(embed=rnd((vocab, E)), layers=layers,
                fc_w=rnd((2 * H, C)), fc_b=rnd((1, C)))


# ------------------------------------------------------------------------------------
# Pure-JAX reference (mirrors PyTorch LSTM_Attention eval-mode semantics)
# ------------------------------------------------------------------------------------
def _lstm_dir_ref(x_tm, w_ih, w_hh, b_ih, b_hh, H, reverse):
    N = x_tm.shape[1]
    xs = x_tm[::-1] if reverse else x_tm

    def step(carry, x_t):
        h, c = carry
        gates = x_t @ w_ih + h @ w_hh + b_ih + b_hh
        i = jax.nn.sigmoid(gates[:, 0 * H:1 * H])
        f = jax.nn.sigmoid(gates[:, 1 * H:2 * H])
        g = jnp.tanh(gates[:, 2 * H:3 * H])
        o = jax.nn.sigmoid(gates[:, 3 * H:4 * H])
        c = f * c + i * g
        h = o * jnp.tanh(c)
        return (h, c), h

    (h_fin, _), hs = lax.scan(step, (jnp.zeros((N, H), jnp.float32),
                                     jnp.zeros((N, H), jnp.float32)), xs)
    if reverse:
        hs = hs[::-1]
    return hs, h_fin


def reference_forward(token_ids, params, H):
    emb = jnp.take(params["embed"], token_ids, axis=0)          # (N, L, E)
    x = jnp.transpose(emb, (1, 0, 2))                           # (L, N, E)
    finals = []
    for layer in params["layers"]:
        f, b = layer["fwd"], layer["bwd"]
        hs_f, hf_f = _lstm_dir_ref(x, f["w_ih"], f["w_hh"], f["b_ih"], f["b_hh"], H, False)
        hs_b, hf_b = _lstm_dir_ref(x, b["w_ih"], b["w_hh"], b["b_ih"], b["b_hh"], H, True)
        x = jnp.concatenate([hs_f, hs_b], axis=-1)              # (L, N, 2H)
        finals.append(jnp.concatenate([hf_f, hf_b], axis=-1))   # (N, 2H)
    query = 0.5 * (finals[0] + finals[1])
    out = jnp.transpose(x, (1, 0, 2))                           # (N, L, 2H)
    scores = jnp.einsum("nld,nd->nl", out, query)
    attn = jax.nn.softmax(scores, axis=1)
    ctx = jnp.einsum("nld,nl->nd", out, attn)
    feat = jnp.maximum(ctx, 0.0)
    z = feat @ params["fc_w"] + params["fc_b"]
    return jax.nn.log_softmax(z, axis=-1)


if __name__ == "__main__":
    vocab, E, H, n_layers, C = 50, 16, 16, 2, 41    # 8H = 128 -> gate slab fills a full vreg
    N, L = 2, 12

    key = jax.random.PRNGKey(0)
    kp, kx = jax.random.split(key)
    params = init_params(kp, vocab, E, H, C, n_layers)
    packed = pack_params(params, H)
    token_ids = jax.random.randint(kx, (N, L), 0, vocab, dtype=jnp.int32)

    roll_sign = calibrate_roll_shift_sign()
    fwd = jax.jit(functools.partial(lstm_attention_forward, roll_sign=roll_sign))
    logp = fwd(token_ids, packed)
    jax.block_until_ready(logp)

    with jax.default_matmul_precision("float32"):
        ref = reference_forward(token_ids, params, H)

    assert logp.shape == (N, C)
    assert bool(jnp.all(jnp.isfinite(logp)))
    assert bool(jnp.allclose(jnp.sum(jnp.exp(logp), axis=-1), 1.0, atol=1e-3))
    assert bool(jnp.allclose(logp, ref, atol=2e-2, rtol=2e-2)), \
        float(jnp.max(jnp.abs(logp - ref)))
    print("KERNEL_OK")
</pallas_src>

<mosaic_0001>
module attributes {stable_mosaic.version = 11 : i64} {
  func.func @_roll_probe_kernel(%arg0: memref<8x128xf32, #tpu.memory_space<vmem>>, %arg1: memref<8x128xf32, #tpu.memory_space<vmem>>) attributes {dimension_semantics = [], scalar_prefetch = 0 : i64, scratch_operands = 0 : i64, tpu.core_type = #tpu.core_type<tc>} {
    %c0 = arith.constant 0 : index
    %c0_0 = arith.constant 0 : index
    %0 = vector.load %arg0[%c0, %c0_0] : memref<8x128xf32, #tpu.memory_space<vmem>>, vector<8x128xf32>
    %c1_i32 = arith.constant 1 : i32
    %1 = tpu.dynamic_rotate %0 by %c1_i32 dim 1 : vector<8x128xf32>, i32 -> vector<8x128xf32>
    %c0_1 = arith.constant 0 : index
    %c0_2 = arith.constant 0 : index
    %2 = vector.load %arg1[%c0_1, %c0_2] : memref<8x128xf32, #tpu.memory_space<vmem>>, vector<8x128xf32>
    tpu.vector_store %arg1[%c0_1, %c0_2], %1 {strides = array<i32>} : memref<8x128xf32, #tpu.memory_space<vmem>>, vector<8x128xf32>,
    return
  }
}

</mosaic_0001>

<llo_original>
// kernel: tpu_custom_call.1
$region0: #{tpu_custom_call.1}
  #allocation0 [shape = 'u32[]', space=smem, size = 0x4, offset = 0x4, fixed_abs, tag = 'smem constant byte address 0x4 - core index']
  #allocation1 [shape = 'u32[144,128]{1,0:T(1,128)}', space=vmem, size = 0x12000, scoped, tag = 'internal scratch']
  %s0 = inlined_call_operand.hbm [shape: f32[8,128], index: 0, kind: input, shape index: {}]
  %s1 = inlined_call_operand.hbm [shape: f32[8,128], index: 1, kind: output, shape index: {}]
  %s2 = sld [smem:[#allocation0]]
  $region18: #{tpu_custom_call.1} parent=0
    _
  %s4 = ssub.s32 1, %s2
  %s5 = scalar_select 0, %s4, %s2
  $region1: #{tpu_custom_call.1} parent=0
    #allocation2 [shape = 'u8[4096]{0}', space=vmem, size = 0x1000, scoped, tag = 'input window, operand 0, single buffered']
    #allocation3 [shape = 's32[1]{0}', space=sflag, size = 0x4, scoped, tag = 'scoped memory for tpu_custom_call.1']
    #allocation4 [shape = 's32[1]{0}', space=sflag, size = 0x4, scoped, tag = 'scoped memory for tpu_custom_call.1']
    #allocation5 [shape = 'u8[4096]{0}', space=vmem, size = 0x1000, scoped, tag = 'output window, operand 0, single buffered']
    %6 = vsyncpa [#allocation3], 0
    %7 = vsyncpa [#allocation4], 0
    // Predicated region
    $region2: #{tpu_custom_call.1} parent=1 // pred_check
      _
    $region3: #{tpu_custom_call.1} parent=1 // pred_check_branch
      %9 = sbr.rel (0) target = $region5
    $region4: #{tpu_custom_call.1} parent=1 // pred_region
      %s11 = ssub.s32 128, 128
      %12 = vsyncadd [#allocation3], %s11
      %s14 = sshll.u32 [#allocation2], 4
      %s15 = int_to_ptr.vmem [resolvable:$true] %s14
      %17 = dma.hbm_to_vmem [thread:$0]  %s0, 128, %s15, [#allocation3]
    $region5: #{tpu_custom_call.1} parent=1 // pred_fallthru
      _
    // Predicated region
    $region6: #{tpu_custom_call.1} parent=1 // pred_check
      _
    $region7: #{tpu_custom_call.1} parent=1 // pred_check_branch
      %19 = sbr.rel (0) target = $region9
    $region8: #{tpu_custom_call.1} parent=1 // pred_region
      %20 = dma.done [#allocation3], 128
    $region9: #{tpu_custom_call.1} parent=1 // pred_fallthru
      _
    %v21 = vld [vmem:[#allocation2] sm:$0xff]
    %22 = vrot.lane.b32.xlu0 %v21, 1
    %v23 = vpop.permute.xlu0 %22
    %24 = vst [vmem:[#allocation5] sm:$0xff] %v23
    // Predicated region
    $region10: #{tpu_custom_call.1} parent=1 // pred_check
      _
    $region11: #{tpu_custom_call.1} parent=1 // pred_check_branch
      %26 = sbr.rel (0) target = $region13
    $region12: #{tpu_custom_call.1} parent=1 // pred_region
      %s28 = ssub.s32 128, 128
      %29 = vsyncadd [#allocation4], %s28
      %s31 = sshll.u32 [#allocation5], 4
      %s32 = int_to_ptr.vmem [resolvable:$true] %s31
      %34 = dma.vmem_to_hbm [thread:$0]  %s32, 128, %s1, [#allocation4]
    $region13: #{tpu_custom_call.1} parent=1 // pred_fallthru
      _
    // Predicated region
    $region14: #{tpu_custom_call.1} parent=1 // pred_check
      _
    $region15: #{tpu_custom_call.1} parent=1 // pred_check_branch
      %36 = sbr.rel (0) target = $region17
    $region16: #{tpu_custom_call.1} parent=1 // pred_region
      %37 = dma.done [#allocation4], 128
    $region17: #{tpu_custom_call.1} parent=1 // pred_fallthru
      _
    %38 = vsyncpa [#allocation3], 1
    %39 = vsyncpa [#allocation4], 1

</llo_original>
